<compile_context>
chip_gen: v5e
topology: v5e:2x2
jax: 0.10.0
libtpu: 0.0.40
codegen_flags: <defaults>
</compile_context>

<pallas_src>
import jax
import jax.numpy as jnp
import numpy as np
from jax.experimental import pallas as pl
from jax.experimental.pallas import tpu as pltpu

_EPS = 1e-8          # matches torch.nn.CosineSimilarity default eps
_TILE_ROWS = 1024    # 1024x128 f32 block = 512 KiB; ~10.3 MiB total VMEM with
                     # 7 double-buffered inputs + resident output -> fits the
                     # default scoped VMEM limit on v5e/v6e/v7x.


def _make_kernel(tile_rows, total_rows, n_chan, sub, ragged):
    """Build the loss-sums kernel (all arguments are static)."""
    n_grp = tile_rows // sub     # number of (sub,128) vreg slabs per tile

    def partial_sum(x):          # (tile_rows,128) -> (sub,128), pure VALU adds
        if n_grp == 1:
            return x
        return jnp.sum(x.reshape(n_grp, sub, 128), axis=0)

    def kernel(mask_ref, pred_ref, target_ref, prop1_ref, prop2_ref,
               tn_ref, pn_ref, out_ref):
        j = pl.program_id(1)

        @pl.when(j == 0)
        def _init():
            out_ref[...] = jnp.zeros_like(out_ref)

        # Row-validity guard for the (possibly partial) last tile.  jnp.where
        # is a select, so garbage (even NaN) in OOB rows never reaches sums.
        if ragged:
            row = j * tile_rows + jax.lax.broadcasted_iota(
                jnp.int32, (tile_rows, 128), 0)
            valid = row < total_rows

            def guard(x):
                return jnp.where(valid, x, 0.0)
        else:
            def guard(x):
                return x

        target = target_ref[0].astype(jnp.float32)
        pred = pred_ref[0].astype(jnp.float32)
        m = mask_ref[0].astype(jnp.float32)          # 0/1 indicator

        l1 = guard(m * jnp.abs(target - pred))        # masked |diff|
        cnt = guard(m)                                # valid-pixel count
        d1 = target - prop1_ref[0].astype(jnp.float32)
        d2 = target - prop2_ref[0].astype(jnp.float32)
        sq1 = guard(d1 * d1)                          # (t - prop1)^2
        sq2 = guard(d2 * d2)                          # (t - prop2)^2

        # Cosine similarity over the channel axis: statically unrolled VALU
        # mul/adds + one EUP rsqrt.  cos = dot / max(||t||*||p||, eps).
        dot = tt = pp = None
        for c in range(n_chan):
            t_c = tn_ref[0, c].astype(jnp.float32)
            p_c = pn_ref[0, c].astype(jnp.float32)
            if dot is None:
                dot, tt, pp = t_c * p_c, t_c * t_c, p_c * p_c
            else:
                dot += t_c * p_c
                tt += t_c * t_c
                pp += p_c * p_c
        cos = guard(dot * jax.lax.rsqrt(jnp.maximum(tt * pp, _EPS * _EPS)))

        # Accumulate lane-dense (sub,128) partials into the resident out block.
        out_ref[0, 0] += partial_sum(l1)
        out_ref[0, 1] += partial_sum(cnt)
        out_ref[0, 2] += partial_sum(sq1)
        out_ref[0, 3] += partial_sum(sq2)
        out_ref[0, 4] += partial_sum(cos)

    return kernel


def masked_l1_loss(valid_mask, pred, target, pred_normal, target_normal,
                   l_adv_r, pred_prop1, pred_prop2):
    assert pred.ndim == target.ndim, 'inconsistent dimensions'
    B, Cd, H, W = pred.shape
    Bn, Cn, Hn, Wn = pred_normal.shape
    per_b = Cd * H * W          # depth elements per batch item
    n_pix = Hn * Wn             # normal-map pixels per batch item
    assert Bn == B and per_b == n_pix, 'depth / normal pixel count mismatch'

    rows = -(-per_b // 128)                 # 128-lane rows per batch item
    pad = rows * 128 - per_b                # only nonzero if H*W % 128 != 0
    tr = min(_TILE_ROWS, rows)              # full extent, or multiple of 8
    nj = -(-rows // tr)
    ragged = (rows % tr) != 0               # last tile partially out of range
    sub = 8 if tr % 8 == 0 else tr          # sublane extent of the partials

    def depth3d(x):                         # (B,Cd,H,W) -> (B, rows, 128), free
        x = x.reshape(B, per_b)
        if pad:
            x = jnp.pad(x, ((0, 0), (0, pad)))
        return x.reshape(B, rows, 128)

    def normal4d(x):                        # (B,Cn,H,W) -> (B,Cn,rows,128), free
        x = x.reshape(B, Cn, n_pix)
        if pad:
            x = jnp.pad(x, ((0, 0), (0, 0), (0, pad)))
        return x.reshape(B, Cn, rows, 128)

    mask3d = depth3d((valid_mask != 0).astype(jnp.int8))   # 1 byte / pixel

    depth_spec = pl.BlockSpec((1, tr, 128), lambda b, j: (b, j, 0))
    normal_spec = pl.BlockSpec((1, Cn, tr, 128), lambda b, j: (b, 0, j, 0))
    out_spec = pl.BlockSpec((1, 5, sub, 128), lambda b, j: (b, 0, 0, 0))

    sums = pl.pallas_call(
        _make_kernel(tr, rows, Cn, sub, ragged),
        out_shape=jax.ShapeDtypeStruct((B, 5, sub, 128), jnp.float32),
        grid=(B, nj),
        in_specs=[depth_spec] * 5 + [normal_spec] * 2,
        out_specs=out_spec,
        compiler_params=pltpu.CompilerParams(
            dimension_semantics=("parallel", "arbitrary"),
            vmem_limit_bytes=32 * 1024 * 1024),
    )(mask3d, depth3d(pred), depth3d(target),
      depth3d(pred_prop1), depth3d(pred_prop2),
      normal4d(target_normal), normal4d(pred_normal))

    # Tiny glue: fold the (B, 5, sub, 128) partials and combine the scalars.
    tot = jnp.sum(sums, axis=(0, 2, 3))
    n_elems = B * per_b
    l1_loss = tot[0] / tot[1]
    l2_loss_prop1 = tot[2] / n_elems
    l2_loss_prop2 = tot[3] / n_elems
    normal_loss = 1.0 - tot[4] / (B * n_pix)
    return (l1_loss + 0.7 * normal_loss + l_adv_r
            + 0.2 * l2_loss_prop1 + 0.2 * l2_loss_prop2)


def masked_l1_loss_ref(valid_mask, pred, target, pred_normal, target_normal,
                       l_adv_r, pred_prop1, pred_prop2):
    mask = valid_mask.astype(jnp.float32)
    l1 = jnp.sum(jnp.abs(target - pred) * mask) / jnp.sum(mask)
    l2p1 = jnp.mean((target - pred_prop1) ** 2)
    l2p2 = jnp.mean((target - pred_prop2) ** 2)
    dot = jnp.sum(target_normal * pred_normal, axis=1)
    denom = jnp.maximum(
        jnp.linalg.norm(target_normal, axis=1) *
        jnp.linalg.norm(pred_normal, axis=1), _EPS)
    normal_loss = 1.0 - jnp.mean(dot / denom)
    return l1 + 0.7 * normal_loss + l_adv_r + 0.2 * l2p1 + 0.2 * l2p2


if __name__ == "__main__":
    key = jax.random.PRNGKey(0)
    ks = jax.random.split(key, 6)
    B, C, H, W = 2, 1, 16, 16

    pred = jax.random.uniform(ks[0], (B, C, H, W), jnp.float32)
    target = jax.random.uniform(ks[1], (B, C, H, W), jnp.float32)
    valid_mask = target > 0.3                      # boolean mask
    pred_prop1 = jax.random.uniform(ks[2], (B, C, H, W), jnp.float32)
    pred_prop2 = jax.random.uniform(ks[3], (B, C, H, W), jnp.float32)
    pred_normal = jax.random.normal(ks[4], (B, 3, H, W), jnp.float32)
    target_normal = jax.random.normal(ks[5], (B, 3, H, W), jnp.float32)
    l_adv_r = 0.05

    loss = masked_l1_loss(valid_mask, pred, target, pred_normal, target_normal,
                          l_adv_r, pred_prop1, pred_prop2)
    loss = jax.block_until_ready(loss)

    ref = masked_l1_loss_ref(valid_mask, pred, target, pred_normal,
                             target_normal, l_adv_r, pred_prop1, pred_prop2)
    assert np.isfinite(float(loss))
    np.testing.assert_allclose(float(loss), float(ref), rtol=1e-4, atol=1e-5)
    print("KERNEL_OK")
</pallas_src>

<mosaic_0001>
module attributes {stable_mosaic.version = 11 : i64} {
  func.func @kernel(%arg0: i32, %arg1: i32, %arg2: memref<1x2x128xi8, #tpu.memory_space<vmem>>, %arg3: memref<1x2x128xf32, #tpu.memory_space<vmem>>, %arg4: memref<1x2x128xf32, #tpu.memory_space<vmem>>, %arg5: memref<1x2x128xf32, #tpu.memory_space<vmem>>, %arg6: memref<1x2x128xf32, #tpu.memory_space<vmem>>, %arg7: memref<1x3x2x128xf32, #tpu.memory_space<vmem>>, %arg8: memref<1x3x2x128xf32, #tpu.memory_space<vmem>>, %arg9: memref<1x5x2x128xf32, #tpu.memory_space<vmem>>) attributes {dimension_semantics = [#tpu.dimension_semantics<parallel>, #tpu.dimension_semantics<arbitrary>], iteration_bounds = array<i64: 2, 1>, scalar_prefetch = 0 : i64, scratch_operands = 0 : i64, tpu.core_type = #tpu.core_type<tc>, window_params = [{transform_indices = @transform_0, window_bounds = array<i64: 1, 2, 128>}, {transform_indices = @transform_1, window_bounds = array<i64: 1, 2, 128>}, {transform_indices = @transform_2, window_bounds = array<i64: 1, 2, 128>}, {transform_indices = @transform_3, window_bounds = array<i64: 1, 2, 128>}, {transform_indices = @transform_4, window_bounds = array<i64: 1, 2, 128>}, {transform_indices = @transform_5, window_bounds = array<i64: 1, 3, 2, 128>}, {transform_indices = @transform_6, window_bounds = array<i64: 1, 3, 2, 128>}, {transform_indices = @transform_7, window_bounds = array<i64: 1, 5, 2, 128>}]} {
    %c0_i32 = arith.constant 0 : i32
    %0 = arith.cmpi eq, %arg1, %c0_i32 : i32
    %1 = arith.extui %0 : i1 to i32
    %c0_i32_0 = arith.constant 0 : i32
    %2 = arith.cmpi ne, %1, %c0_i32_0 : i32
    scf.if %2 {
      %cst_75 = arith.constant 0.000000e+00 : f32
      %83 = vector.broadcast %cst_75 : f32 to vector<1x5x2x128xf32>
      %c0_76 = arith.constant 0 : index
      %c0_77 = arith.constant 0 : index
      %c0_78 = arith.constant 0 : index
      %c0_79 = arith.constant 0 : index
      %84 = vector.load %arg9[%c0_76, %c0_77, %c0_78, %c0_79] : memref<1x5x2x128xf32, #tpu.memory_space<vmem>>, vector<1x5x2x128xf32>
      tpu.vector_store %arg9[%c0_76, %c0_77, %c0_78, %c0_79], %83 {strides = array<i32>} : memref<1x5x2x128xf32, #tpu.memory_space<vmem>>, vector<1x5x2x128xf32>,
    } else {
    }
    %c0 = arith.constant 0 : index
    %c0_1 = arith.constant 0 : index
    %c0_2 = arith.constant 0 : index
    %3 = vector.load %arg4[%c0, %c0_1, %c0_2] : memref<1x2x128xf32, #tpu.memory_space<vmem>>, vector<1x2x128xf32>
    %4 = vector.shape_cast %3 : vector<1x2x128xf32> to vector<2x128xf32>
    %c0_3 = arith.constant 0 : index
    %c0_4 = arith.constant 0 : index
    %c0_5 = arith.constant 0 : index
    %5 = vector.load %arg3[%c0_3, %c0_4, %c0_5] : memref<1x2x128xf32, #tpu.memory_space<vmem>>, vector<1x2x128xf32>
    %6 = vector.shape_cast %5 : vector<1x2x128xf32> to vector<2x128xf32>
    %c0_6 = arith.constant 0 : index
    %c0_7 = arith.constant 0 : index
    %c0_8 = arith.constant 0 : index
    %7 = vector.load %arg2[%c0_6, %c0_7, %c0_8] : memref<1x2x128xi8, #tpu.memory_space<vmem>>, vector<1x2x128xi8>
    %8 = vector.shape_cast %7 : vector<1x2x128xi8> to vector<2x128xi8>
    %9 = arith.sitofp %8 : vector<2x128xi8> to vector<2x128xf32>
    %10 = arith.subf %4, %6 : vector<2x128xf32>
    %11 = math.absf %10 : vector<2x128xf32>
    %12 = arith.mulf %9, %11 : vector<2x128xf32>
    %c0_9 = arith.constant 0 : index
    %c0_10 = arith.constant 0 : index
    %c0_11 = arith.constant 0 : index
    %13 = vector.load %arg5[%c0_9, %c0_10, %c0_11] : memref<1x2x128xf32, #tpu.memory_space<vmem>>, vector<1x2x128xf32>
    %14 = vector.shape_cast %13 : vector<1x2x128xf32> to vector<2x128xf32>
    %15 = arith.subf %4, %14 : vector<2x128xf32>
    %c0_12 = arith.constant 0 : index
    %c0_13 = arith.constant 0 : index
    %c0_14 = arith.constant 0 : index
    %16 = vector.load %arg6[%c0_12, %c0_13, %c0_14] : memref<1x2x128xf32, #tpu.memory_space<vmem>>, vector<1x2x128xf32>
    %17 = vector.shape_cast %16 : vector<1x2x128xf32> to vector<2x128xf32>
    %18 = arith.subf %4, %17 : vector<2x128xf32>
    %19 = arith.mulf %15, %15 : vector<2x128xf32>
    %20 = arith.mulf %18, %18 : vector<2x128xf32>
    %c0_15 = arith.constant 0 : index
    %c0_16 = arith.constant 0 : index
    %c0_17 = arith.constant 0 : index
    %c0_18 = arith.constant 0 : index
    %21 = vector.load %arg7[%c0_15, %c0_16, %c0_17, %c0_18] : memref<1x3x2x128xf32, #tpu.memory_space<vmem>>, vector<1x1x2x128xf32>
    %22 = vector.shape_cast %21 : vector<1x1x2x128xf32> to vector<2x128xf32>
    %c0_19 = arith.constant 0 : index
    %c0_20 = arith.constant 0 : index
    %c0_21 = arith.constant 0 : index
    %c0_22 = arith.constant 0 : index
    %23 = vector.load %arg8[%c0_19, %c0_20, %c0_21, %c0_22] : memref<1x3x2x128xf32, #tpu.memory_space<vmem>>, vector<1x1x2x128xf32>
    %24 = vector.shape_cast %23 : vector<1x1x2x128xf32> to vector<2x128xf32>
    %25 = arith.mulf %22, %24 : vector<2x128xf32>
    %26 = arith.mulf %22, %22 : vector<2x128xf32>
    %27 = arith.mulf %24, %24 : vector<2x128xf32>
    %c0_23 = arith.constant 0 : index
    %c1 = arith.constant 1 : index
    %c0_24 = arith.constant 0 : index
    %c0_25 = arith.constant 0 : index
    %28 = vector.load %arg7[%c0_23, %c1, %c0_24, %c0_25] : memref<1x3x2x128xf32, #tpu.memory_space<vmem>>, vector<1x1x2x128xf32>
    %29 = vector.shape_cast %28 : vector<1x1x2x128xf32> to vector<2x128xf32>
    %c0_26 = arith.constant 0 : index
    %c1_27 = arith.constant 1 : index
    %c0_28 = arith.constant 0 : index
    %c0_29 = arith.constant 0 : index
    %30 = vector.load %arg8[%c0_26, %c1_27, %c0_28, %c0_29] : memref<1x3x2x128xf32, #tpu.memory_space<vmem>>, vector<1x1x2x128xf32>
    %31 = vector.shape_cast %30 : vector<1x1x2x128xf32> to vector<2x128xf32>
    %32 = arith.mulf %29, %31 : vector<2x128xf32>
    %33 = arith.addf %25, %32 : vector<2x128xf32>
    %34 = arith.mulf %29, %29 : vector<2x128xf32>
    %35 = arith.addf %26, %34 : vector<2x128xf32>
    %36 = arith.mulf %31, %31 : vector<2x128xf32>
    %37 = arith.addf %27, %36 : vector<2x128xf32>
    %c0_30 = arith.constant 0 : index
    %c2 = arith.constant 2 : index
    %c0_31 = arith.constant 0 : index
    %c0_32 = arith.constant 0 : index
    %38 = vector.load %arg7[%c0_30, %c2, %c0_31, %c0_32] : memref<1x3x2x128xf32, #tpu.memory_space<vmem>>, vector<1x1x2x128xf32>
    %39 = vector.shape_cast %38 : vector<1x1x2x128xf32> to vector<2x128xf32>
    %c0_33 = arith.constant 0 : index
    %c2_34 = arith.constant 2 : index
    %c0_35 = arith.constant 0 : index
    %c0_36 = arith.constant 0 : index
    %40 = vector.load %arg8[%c0_33, %c2_34, %c0_35, %c0_36] : memref<1x3x2x128xf32, #tpu.memory_space<vmem>>, vector<1x1x2x128xf32>
    %41 = vector.shape_cast %40 : vector<1x1x2x128xf32> to vector<2x128xf32>
    %42 = arith.mulf %39, %41 : vector<2x128xf32>
    %43 = arith.addf %33, %42 : vector<2x128xf32>
    %44 = arith.mulf %39, %39 : vector<2x128xf32>
    %45 = arith.addf %35, %44 : vector<2x128xf32>
    %46 = arith.mulf %41, %41 : vector<2x128xf32>
    %47 = arith.addf %37, %46 : vector<2x128xf32>
    %48 = arith.mulf %45, %47 : vector<2x128xf32>
    %cst = arith.constant 1.000000e-16 : f32
    %49 = vector.broadcast %cst : f32 to vector<2x128xf32>
    %50 = arith.maximumf %48, %49 : vector<2x128xf32>
    %51 = math.rsqrt %50 : vector<2x128xf32>
    %52 = arith.mulf %43, %51 : vector<2x128xf32>
    %c0_37 = arith.constant 0 : index
    %c0_38 = arith.constant 0 : index
    %c0_39 = arith.constant 0 : index
    %c0_40 = arith.constant 0 : index
    %53 = vector.load %arg9[%c0_37, %c0_38, %c0_39, %c0_40] : memref<1x5x2x128xf32, #tpu.memory_space<vmem>>, vector<1x1x2x128xf32>
    %54 = vector.shape_cast %53 : vector<1x1x2x128xf32> to vector<2x128xf32>
    %55 = arith.addf %54, %12 : vector<2x128xf32>
    %c0_41 = arith.constant 0 : index
    %c0_42 = arith.constant 0 : index
    %c0_43 = arith.constant 0 : index
    %c0_44 = arith.constant 0 : index
    %56 = vector.load %arg9[%c0_41, %c0_42, %c0_43, %c0_44] : memref<1x5x2x128xf32, #tpu.memory_space<vmem>>, vector<1x1x2x128xf32>
    %57 = vector.shape_cast %56 : vector<1x1x2x128xf32> to vector<2x128xf32>
    %58 = vector.shape_cast %55 : vector<2x128xf32> to vector<1x1x2x128xf32>
    tpu.vector_store %arg9[%c0_41, %c0_42, %c0_43, %c0_44], %58 {strides = array<i32>} : memref<1x5x2x128xf32, #tpu.memory_space<vmem>>, vector<1x1x2x128xf32>,
    %c0_45 = arith.constant 0 : index
    %c1_46 = arith.constant 1 : index
    %c0_47 = arith.constant 0 : index
    %c0_48 = arith.constant 0 : index
    %59 = vector.load %arg9[%c0_45, %c1_46, %c0_47, %c0_48] : memref<1x5x2x128xf32, #tpu.memory_space<vmem>>, vector<1x1x2x128xf32>
    %60 = vector.shape_cast %59 : vector<1x1x2x128xf32> to vector<2x128xf32>
    %61 = arith.addf %60, %9 : vector<2x128xf32>
    %c0_49 = arith.constant 0 : index
    %c1_50 = arith.constant 1 : index
    %c0_51 = arith.constant 0 : index
    %c0_52 = arith.constant 0 : index
    %62 = vector.load %arg9[%c0_49, %c1_50, %c0_51, %c0_52] : memref<1x5x2x128xf32, #tpu.memory_space<vmem>>, vector<1x1x2x128xf32>
    %63 = vector.shape_cast %62 : vector<1x1x2x128xf32> to vector<2x128xf32>
    %64 = vector.shape_cast %61 : vector<2x128xf32> to vector<1x1x2x128xf32>
    tpu.vector_store %arg9[%c0_49, %c1_50, %c0_51, %c0_52], %64 {strides = array<i32>} : memref<1x5x2x128xf32, #tpu.memory_space<vmem>>, vector<1x1x2x128xf32>,
    %c0_53 = arith.constant 0 : index
    %c2_54 = arith.constant 2 : index
    %c0_55 = arith.constant 0 : index
    %c0_56 = arith.constant 0 : index
    %65 = vector.load %arg9[%c0_53, %c2_54, %c0_55, %c0_56] : memref<1x5x2x128xf32, #tpu.memory_space<vmem>>, vector<1x1x2x128xf32>
    %66 = vector.shape_cast %65 : vector<1x1x2x128xf32> to vector<2x128xf32>
    %67 = arith.addf %66, %19 : vector<2x128xf32>
    %c0_57 = arith.constant 0 : index
    %c2_58 = arith.constant 2 : index
    %c0_59 = arith.constant 0 : index
    %c0_60 = arith.constant 0 : index
    %68 = vector.load %arg9[%c0_57, %c2_58, %c0_59, %c0_60] : memref<1x5x2x128xf32, #tpu.memory_space<vmem>>, vector<1x1x2x128xf32>
    %69 = vector.shape_cast %68 : vector<1x1x2x128xf32> to vector<2x128xf32>
    %70 = vector.shape_cast %67 : vector<2x128xf32> to vector<1x1x2x128xf32>
    tpu.vector_store %arg9[%c0_57, %c2_58, %c0_59, %c0_60], %70 {strides = array<i32>} : memref<1x5x2x128xf32, #tpu.memory_space<vmem>>, vector<1x1x2x128xf32>,
    %c0_61 = arith.constant 0 : index
    %c3 = arith.constant 3 : index
    %c0_62 = arith.constant 0 : index
    %c0_63 = arith.constant 0 : index
    %71 = vector.load %arg9[%c0_61, %c3, %c0_62, %c0_63] : memref<1x5x2x128xf32, #tpu.memory_space<vmem>>, vector<1x1x2x128xf32>
    %72 = vector.shape_cast %71 : vector<1x1x2x128xf32> to vector<2x128xf32>
    %73 = arith.addf %72, %20 : vector<2x128xf32>
    %c0_64 = arith.constant 0 : index
    %c3_65 = arith.constant 3 : index
    %c0_66 = arith.constant 0 : index
    %c0_67 = arith.constant 0 : index
    %74 = vector.load %arg9[%c0_64, %c3_65, %c0_66, %c0_67] : memref<1x5x2x128xf32, #tpu.memory_space<vmem>>, vector<1x1x2x128xf32>
    %75 = vector.shape_cast %74 : vector<1x1x2x128xf32> to vector<2x128xf32>
    %76 = vector.shape_cast %73 : vector<2x128xf32> to vector<1x1x2x128xf32>
    tpu.vector_store %arg9[%c0_64, %c3_65, %c0_66, %c0_67], %76 {strides = array<i32>} : memref<1x5x2x128xf32, #tpu.memory_space<vmem>>, vector<1x1x2x128xf32>,
    %c0_68 = arith.constant 0 : index
    %c4 = arith.constant 4 : index
    %c0_69 = arith.constant 0 : index
    %c0_70 = arith.constant 0 : index
    %77 = vector.load %arg9[%c0_68, %c4, %c0_69, %c0_70] : memref<1x5x2x128xf32, #tpu.memory_space<vmem>>, vector<1x1x2x128xf32>
    %78 = vector.shape_cast %77 : vector<1x1x2x128xf32> to vector<2x128xf32>
    %79 = arith.addf %78, %52 : vector<2x128xf32>
    %c0_71 = arith.constant 0 : index
    %c4_72 = arith.constant 4 : index
    %c0_73 = arith.constant 0 : index
    %c0_74 = arith.constant 0 : index
    %80 = vector.load %arg9[%c0_71, %c4_72, %c0_73, %c0_74] : memref<1x5x2x128xf32, #tpu.memory_space<vmem>>, vector<1x1x2x128xf32>
    %81 = vector.shape_cast %80 : vector<1x1x2x128xf32> to vector<2x128xf32>
    %82 = vector.shape_cast %79 : vector<2x128xf32> to vector<1x1x2x128xf32>
    tpu.vector_store %arg9[%c0_71, %c4_72, %c0_73, %c0_74], %82 {strides = array<i32>} : memref<1x5x2x128xf32, #tpu.memory_space<vmem>>, vector<1x1x2x128xf32>,
    return
  }
  func.func @transform_0(%arg0: i32, %arg1: i32) -> (i32, i32, i32) {
    %c0_i32 = arith.constant 0 : i32
    %c0_i32_0 = arith.constant 0 : i32
    return %arg0, %arg1, %c0_i32 : i32, i32, i32
  }
  func.func @transform_1(%arg0: i32, %arg1: i32) -> (i32, i32, i32) {
    %c0_i32 = arith.constant 0 : i32
    %c0_i32_0 = arith.constant 0 : i32
    return %arg0, %arg1, %c0_i32 : i32, i32, i32
  }
  func.func @transform_2(%arg0: i32, %arg1: i32) -> (i32, i32, i32) {
    %c0_i32 = arith.constant 0 : i32
    %c0_i32_0 = arith.constant 0 : i32
    return %arg0, %arg1, %c0_i32 : i32, i32, i32
  }
  func.func @transform_3(%arg0: i32, %arg1: i32) -> (i32, i32, i32) {
    %c0_i32 = arith.constant 0 : i32
    %c0_i32_0 = arith.constant 0 : i32
    return %arg0, %arg1, %c0_i32 : i32, i32, i32
  }
  func.func @transform_4(%arg0: i32, %arg1: i32) -> (i32, i32, i32) {
    %c0_i32 = arith.constant 0 : i32
    %c0_i32_0 = arith.constant 0 : i32
    return %arg0, %arg1, %c0_i32 : i32, i32, i32
  }
  func.func @transform_5(%arg0: i32, %arg1: i32) -> (i32, i32, i32, i32) {
    %c0_i32 = arith.constant 0 : i32
    %c0_i32_0 = arith.constant 0 : i32
    %c0_i32_1 = arith.constant 0 : i32
    return %arg0, %c0_i32, %arg1, %c0_i32_0 : i32, i32, i32, i32
  }
  func.func @transform_6(%arg0: i32, %arg1: i32) -> (i32, i32, i32, i32) {
    %c0_i32 = arith.constant 0 : i32
    %c0_i32_0 = arith.constant 0 : i32
    %c0_i32_1 = arith.constant 0 : i32
    return %arg0, %c0_i32, %arg1, %c0_i32_0 : i32, i32, i32, i32
  }
  func.func @transform_7(%arg0: i32, %arg1: i32) -> (i32, i32, i32, i32) {
    %c0_i32 = arith.constant 0 : i32
    %c0_i32_0 = arith.constant 0 : i32
    %c0_i32_1 = arith.constant 0 : i32
    %c0_i32_2 = arith.constant 0 : i32
    return %arg0, %c0_i32, %c0_i32_0, %c0_i32_1 : i32, i32, i32, i32
  }
}

</mosaic_0001>

<llo_original>
// kernel: tpu_custom_call.1
$region0: #{tpu_custom_call.1}
  #allocation0 [shape = 'u32[]', space=smem, size = 0x4, offset = 0x4, fixed_abs, tag = 'smem constant byte address 0x4 - core index']
  #allocation1 [shape = 'u32[72,128]{1,0:T(1,128)}', space=vmem, size = 0x9000, scoped, tag = 'internal scratch']
  %s0 = inlined_call_operand.hbm [shape: s8[2,2,128], index: 0, kind: input, shape index: {}]
  %s1 = inlined_call_operand.hbm [shape: f32[2,2,128], index: 1, kind: input, shape index: {}]
  %s2 = inlined_call_operand.hbm [shape: f32[2,2,128], index: 2, kind: input, shape index: {}]
  %s3 = inlined_call_operand.hbm [shape: f32[2,2,128], index: 3, kind: input, shape index: {}]
  %s4 = inlined_call_operand.hbm [shape: f32[2,2,128], index: 4, kind: input, shape index: {}]
  %s5 = inlined_call_operand.hbm [shape: f32[2,3,2,128], index: 5, kind: input, shape index: {}]
  %s6 = inlined_call_operand.hbm [shape: f32[2,3,2,128], index: 6, kind: input, shape index: {}]
  %s7 = inlined_call_operand.hbm [shape: f32[2,5,2,128], index: 7, kind: output, shape index: {}]
  %s8 = sld [smem:[#allocation0]]
  $region93: #{tpu_custom_call.1} parent=0
    _
  %s10 = ssub.s32 1, %s8
  %s11 = scalar_select 0, %s10, %s8
  $region1: #{tpu_custom_call.1} parent=0
    #allocation2 [shape = 'u8[1024]{0}', space=vmem, size = 0x400, scoped, tag = 'input window, operand 0']
    #allocation3 [shape = 's32[2]{0}', space=sflag, size = 0x8, scoped, tag = 'scoped memory for tpu_custom_call.1']
    #allocation4 [shape = 's32[2]{0}', space=sflag, size = 0x8, scoped, tag = 'scoped memory for tpu_custom_call.1']
    #allocation5 [shape = 'u8[2048]{0}', space=vmem, size = 0x800, scoped, tag = 'input window, operand 1']
    #allocation6 [shape = 's32[2]{0}', space=sflag, size = 0x8, scoped, tag = 'scoped memory for tpu_custom_call.1']
    #allocation7 [shape = 'u8[2048]{0}', space=vmem, size = 0x800, scoped, tag = 'input window, operand 2']
    #allocation8 [shape = 'u8[2048]{0}', space=vmem, size = 0x800, scoped, tag = 'input window, operand 3']
    #allocation9 [shape = 's32[2]{0}', space=sflag, size = 0x8, scoped, tag = 'scoped memory for tpu_custom_call.1']
    #allocation10 [shape = 'u8[2048]{0}', space=vmem, size = 0x800, scoped, tag = 'input window, operand 4']
    #allocation11 [shape = 'u8[6144]{0}', space=vmem, size = 0x1800, scoped, tag = 'input window, operand 5']
    #allocation12 [shape = 's32[2]{0}', space=sflag, size = 0x8, scoped, tag = 'scoped memory for tpu_custom_call.1']
    #allocation13 [shape = 'u8[6144]{0}', space=vmem, size = 0x1800, scoped, tag = 'input window, operand 6']
    #allocation14 [shape = 'u8[10240]{0}', space=vmem, size = 0x2800, scoped, tag = 'output window, operand 0']
    %12 = vsyncpa [#allocation3], 0
    %s13 = scalar_lea.sflag [#allocation3], 1
    %14 = vsyncpa %s13, 0
    %15 = vsyncpa [#allocation6], 0
    %s16 = scalar_lea.sflag [#allocation6], 1
    %17 = vsyncpa %s16, 0
    %18 = vsyncpa [#allocation9], 0
    %s19 = scalar_lea.sflag [#allocation9], 1
    %20 = vsyncpa %s19, 0
    %21 = vsyncpa [#allocation12], 0
    %s22 = scalar_lea.sflag [#allocation12], 1
    %23 = vsyncpa %s22, 0
    %24 = vsyncpa [#allocation4], 0
    %s25 = scalar_lea.sflag [#allocation4], 1
    %26 = vsyncpa %s25, 0
    loop: start=0, step=1, limit=4
    $region2: #{tpu_custom_call.1} parent=1 // loop_pre_header
      _
    $region3: #{tpu_custom_call.1} parent=1 // loop_header
      %s28 = sphi 0, %s32
      %p29 = scmp.ge.s32.totalorder %s28, 4
      %s35 = sphi 0, %s47
      %s36 = sphi 0, %s43
      %s37 = sphi 0, %s35
      %s38 = sphi 0, %s36
      %s39 = sphi 0, %s37
      %s40 = sphi 0, %s38
      %s52 = sphi 0, %s54
      %s55 = sphi 0, %s52
      %s56 = sphi 0, %s55
      %s72 = sphi 0, %s56
      %s80 = sphi 0, %s82
      %s83 = sphi 0, %s80
      %s84 = sphi 0, %s83
      %s100 = sphi 0, %s84
      %s108 = sphi 0, %s110
      %s111 = sphi 0, %s108
      %s112 = sphi 0, %s111
      %s128 = sphi 0, %s112
      %s136 = sphi 0, %s138
      %s139 = sphi 0, %s136
      %s140 = sphi 0, %s139
      %s156 = sphi 0, %s140
      %s164 = sphi 0, %s166
      %s167 = sphi 0, %s164
      %s168 = sphi 0, %s167
      %s184 = sphi 0, %s168
      %s192 = sphi 0, %s194
      %s195 = sphi 0, %s192
      %s196 = sphi 0, %s195
      %s212 = sphi 0, %s196
      %s220 = sphi 0, %s222
      %s223 = sphi 0, %s220
      %s224 = sphi 0, %s223
      %s240 = sphi 0, %s224
      %s246 = sphi 0, %s248
      %s249 = sphi 0, %s246
      %s250 = sphi 0, %s249
      %s266 = sphi 0, %s250
    $region4: #{tpu_custom_call.1} parent=1 // loop_header_branch
      %31 = sbr.rel (%p29) target = $region8
    $region5: #{tpu_custom_call.1} parent=1 // loop_body
      %s33 = ssub.s32 %s28, 1
      %s34 = ssub.s32 %s28, 2
      %s41 = sadd.s32 1, %s36
      %p42 = scmp.ge.s32.totalorder %s41, 1
      %s43 = scalar_select %p42, 0, %s41
      %s44 = sadd.s32 1, %s35
      %s45 = scalar_select %p42, %s44, %s35
      %p46 = scmp.ge.s32.totalorder %s45, 2
      %s47 = scalar_select %p46, 0, %s45
      %s48 = ssub.s32 %s35, %s47
      %s49 = ssub.s32 %s36, %s43
      %s50 = sor.u32 %s48, %s49
      %p51 = scmp.eq.s32.totalorder %s50, 0
      %s53 = sadd.s32 %s52, 1
      %s54 = scalar_select %p51, %s52, %s53
      %p57 = pneg %p51
      %p58 = scmp.eq.s32.totalorder %s28, 1
      %p59 = por %p57, %p58
      %p60 = scmp.ne.s32.totalorder %s52, %s55
      %p61 = scmp.eq.s32.totalorder %s28, 0
      %p62 = por %p60, %p61
      %p63 = scmp.ne.s32.totalorder %s52, %s55
      %p64 = scmp.eq.s32.totalorder %s33, 1
      %p65 = por %p63, %p64
      %p66 = scmp.ne.s32.totalorder %s55, %s56
      %p67 = scmp.eq.s32.totalorder %s33, 0
      %p68 = por %p66, %p67
      %p69 = scmp.ne.s32.totalorder %s55, %s56
      %p70 = scmp.eq.s32.totalorder %s34, 1
      %p71 = por %p69, %p70
      %p73 = scmp.ne.s32.totalorder %s56, %s72
      %p74 = scmp.eq.s32.totalorder %s34, 0
      %p75 = por %p73, %p74
      %s76 = ssub.s32 %s35, %s47
      %s77 = ssub.s32 %s36, %s43
      %s78 = sor.u32 %s76, %s77
      %p79 = scmp.eq.s32.totalorder %s78, 0
      %s81 = sadd.s32 %s80, 1
      %s82 = scalar_select %p79, %s80, %s81
      %p85 = pneg %p79
      %p86 = scmp.eq.s32.totalorder %s28, 1
      %p87 = por %p85, %p86
      %p88 = scmp.ne.s32.totalorder %s80, %s83
      %p89 = scmp.eq.s32.totalorder %s28, 0
      %p90 = por %p88, %p89
      %p91 = scmp.ne.s32.totalorder %s80, %s83
      %p92 = scmp.eq.s32.totalorder %s33, 1
      %p93 = por %p91, %p92
      %p94 = scmp.ne.s32.totalorder %s83, %s84
      %p95 = scmp.eq.s32.totalorder %s33, 0
      %p96 = por %p94, %p95
      %p97 = scmp.ne.s32.totalorder %s83, %s84
      %p98 = scmp.eq.s32.totalorder %s34, 1
      %p99 = por %p97, %p98
      %p101 = scmp.ne.s32.totalorder %s84, %s100
      %p102 = scmp.eq.s32.totalorder %s34, 0
      %p103 = por %p101, %p102
      %s104 = ssub.s32 %s35, %s47
      %s105 = ssub.s32 %s36, %s43
      %s106 = sor.u32 %s104, %s105
      %p107 = scmp.eq.s32.totalorder %s106, 0
      %s109 = sadd.s32 %s108, 1
      %s110 = scalar_select %p107, %s108, %s109
      %p113 = pneg %p107
      %p114 = scmp.eq.s32.totalorder %s28, 1
      %p115 = por %p113, %p114
      %p116 = scmp.ne.s32.totalorder %s108, %s111
      %p117 = scmp.eq.s32.totalorder %s28, 0
      %p118 = por %p116, %p117
      %p119 = scmp.ne.s32.totalorder %s108, %s111
      %p120 = scmp.eq.s32.totalorder %s33, 1
      %p121 = por %p119, %p120
      %p122 = scmp.ne.s32.totalorder %s111, %s112
      %p123 = scmp.eq.s32.totalorder %s33, 0
      %p124 = por %p122, %p123
      %p125 = scmp.ne.s32.totalorder %s111, %s112
      %p126 = scmp.eq.s32.totalorder %s34, 1
      %p127 = por %p125, %p126
      %p129 = scmp.ne.s32.totalorder %s112, %s128
      %p130 = scmp.eq.s32.totalorder %s34, 0
      %p131 = por %p129, %p130
      %s132 = ssub.s32 %s35, %s47
      %s133 = ssub.s32 %s36, %s43
      %s134 = sor.u32 %s132, %s133
      %p135 = scmp.eq.s32.totalorder %s134, 0
      %s137 = sadd.s32 %s136, 1
      %s138 = scalar_select %p135, %s136, %s137
      %p141 = pneg %p135
      %p142 = scmp.eq.s32.totalorder %s28, 1
      %p143 = por %p141, %p142
      %p144 = scmp.ne.s32.totalorder %s136, %s139
      %p145 = scmp.eq.s32.totalorder %s28, 0
      %p146 = por %p144, %p145
      %p147 = scmp.ne.s32.totalorder %s136, %s139
      %p148 = scmp.eq.s32.totalorder %s33, 1
      %p149 = por %p147, %p148
      %p150 = scmp.ne.s32.totalorder %s139, %s140
      %p151 = scmp.eq.s32.totalorder %s33, 0
      %p152 = por %p150, %p151
      %p153 = scmp.ne.s32.totalorder %s139, %s140
      %p154 = scmp.eq.s32.totalorder %s34, 1
      %p155 = por %p153, %p154
      %p157 = scmp.ne.s32.totalorder %s140, %s156
      %p158 = scmp.eq.s32.totalorder %s34, 0
      %p159 = por %p157, %p158
      %s160 = ssub.s32 %s35, %s47
      %s161 = ssub.s32 %s36, %s43
      %s162 = sor.u32 %s160, %s161
      %p163 = scmp.eq.s32.totalorder %s162, 0
      %s165 = sadd.s32 %s164, 1
      %s166 = scalar_select %p163, %s164, %s165
      %p169 = pneg %p163
      %p170 = scmp.eq.s32.totalorder %s28, 1
      %p171 = por %p169, %p170
      %p172 = scmp.ne.s32.totalorder %s164, %s167
      %p173 = scmp.eq.s32.totalorder %s28, 0
      %p174 = por %p172, %p173
      %p175 = scmp.ne.s32.totalorder %s164, %s167
      %p176 = scmp.eq.s32.totalorder %s33, 1
      %p177 = por %p175, %p176
      %p178 = scmp.ne.s32.totalorder %s167, %s168
      %p179 = scmp.eq.s32.totalorder %s33, 0
      %p180 = por %p178, %p179
      %p181 = scmp.ne.s32.totalorder %s167, %s168
      %p182 = scmp.eq.s32.totalorder %s34, 1
      %p183 = por %p181, %p182
      %p185 = scmp.ne.s32.totalorder %s168, %s184
      %p186 = scmp.eq.s32.totalorder %s34, 0
      %p187 = por %p185, %p186
      %s188 = ssub.s32 %s35, %s47
      %s189 = ssub.s32 %s36, %s43
      %s190 = sor.u32 %s188, %s189
      %p191 = scmp.eq.s32.totalorder %s190, 0
      %s193 = sadd.s32 %s192, 1
      %s194 = scalar_select %p191, %s192, %s193
      %p197 = pneg %p191
      %p198 = scmp.eq.s32.totalorder %s28, 1
      %p199 = por %p197, %p198
      %p200 = scmp.ne.s32.totalorder %s192, %s195
      %p201 = scmp.eq.s32.totalorder %s28, 0
      %p202 = por %p200, %p201
      %p203 = scmp.ne.s32.totalorder %s192, %s195
      %p204 = scmp.eq.s32.totalorder %s33, 1
      %p205 = por %p203, %p204
      %p206 = scmp.ne.s32.totalorder %s195, %s196
      %p207 = scmp.eq.s32.totalorder %s33, 0
      %p208 = por %p206, %p207
      %p209 = scmp.ne.s32.totalorder %s195, %s196
      %p210 = scmp.eq.s32.totalorder %s34, 1
      %p211 = por %p209, %p210
      %p213 = scmp.ne.s32.totalorder %s196, %s212
      %p214 = scmp.eq.s32.totalorder %s34, 0
      %p215 = por %p213, %p214
      %s216 = ssub.s32 %s35, %s47
      %s217 = ssub.s32 %s36, %s43
      %s218 = sor.u32 %s216, %s217
      %p219 = scmp.eq.s32.totalorder %s218, 0
      %s221 = sadd.s32 %s220, 1
      %s222 = scalar_select %p219, %s220, %s221
      %p225 = pneg %p219
      %p226 = scmp.eq.s32.totalorder %s28, 1
      %p227 = por %p225, %p226
      %p228 = scmp.ne.s32.totalorder %s220, %s223
      %p229 = scmp.eq.s32.totalorder %s28, 0
      %p230 = por %p228, %p229
      %p231 = scmp.ne.s32.totalorder %s220, %s223
      %p232 = scmp.eq.s32.totalorder %s33, 1
      %p233 = por %p231, %p232
      %p234 = scmp.ne.s32.totalorder %s223, %s224
      %p235 = scmp.eq.s32.totalorder %s33, 0
      %p236 = por %p234, %p235
      %p237 = scmp.ne.s32.totalorder %s223, %s224
      %p238 = scmp.eq.s32.totalorder %s34, 1
      %p239 = por %p237, %p238
      %p241 = scmp.ne.s32.totalorder %s224, %s240
      %p242 = scmp.eq.s32.totalorder %s34, 0
      %p243 = por %p241, %p242
      %s244 = ssub.s32 %s35, %s47
      %p245 = scmp.eq.s32.totalorder %s244, 0
      %s247 = sadd.s32 %s246, 1
      %s248 = scalar_select %p245, %s246, %s247
      %p251 = pneg %p245
      %p252 = scmp.eq.s32.totalorder %s28, 1
      %p253 = por %p251, %p252
      %p254 = scmp.ne.s32.totalorder %s246, %s249
      %p255 = scmp.eq.s32.totalorder %s28, 0
      %p256 = por %p254, %p255
      %p257 = scmp.ne.s32.totalorder %s246, %s249
      %p258 = scmp.eq.s32.totalorder %s33, 1
      %p259 = por %p257, %p258
      %p260 = scmp.ne.s32.totalorder %s249, %s250
      %p261 = scmp.eq.s32.totalorder %s33, 0
      %p262 = por %p260, %p261
      %p263 = scmp.ne.s32.totalorder %s249, %s250
      %p264 = scmp.eq.s32.totalorder %s34, 1
      %p265 = por %p263, %p264
      %p267 = scmp.ne.s32.totalorder %s250, %s266
      %p268 = scmp.eq.s32.totalorder %s34, 0
      %p269 = por %p267, %p268
      %p270 = scmp.le.s32.totalorder 1, %s28
      %p271 = scmp.lt.s32.totalorder %s28, 3
      %p272 = pnand %p270, %p271
      %p273 = pneg %p272
      // Predicated region
      $region9: #{tpu_custom_call.1} parent=5 // pred_check
        _
      $region10: #{tpu_custom_call.1} parent=5 // pred_check_branch
        %275 = sbr.rel (%p272) target = $region12
      $region11: #{tpu_custom_call.1} parent=5 // pred_region
        %s276 = ssub.s32 %s28, 1
      $region12: #{tpu_custom_call.1} parent=5 // pred_fallthru
        _
      %p277 = scmp.lt.s32.totalorder %s28, 2
      // Predicated region
      $region13: #{tpu_custom_call.1} parent=5 // pred_check
        %p278 = pneg %p277
      $region14: #{tpu_custom_call.1} parent=5 // pred_check_branch
        %280 = sbr.rel (%p278) target = $region16
      $region15: #{tpu_custom_call.1} parent=5 // pred_region
        // Predicated region
        $region17: #{tpu_custom_call.1} parent=15 // pred_check
          %p281 = pneg %p62
        $region18: #{tpu_custom_call.1} parent=15 // pred_check_branch
          %283 = sbr.rel (%p281) target = $region20
        $region19: #{tpu_custom_call.1} parent=15 // pred_region
          %s284 = sand.u32 %s52, 1
          %s285 = scalar_lea.sflag [#allocation3], %s284
          %s286 = sand.u32 %s52, 1
          %s287 = scalar_lea.vmem [#allocation2], %s286
          %289 = vsyncadd %s285, 0
          %s290 = sadd.s32 %s36, %s35
          %s291 = scalar_lea.hbm %s0, %s290
          %s293 = sshll.u32 %s291, 4
          %s294 = int_to_ptr.hbm [resolvable:$true] %s293
          %s295 = sshll.u32 %s287, 4
          %s296 = int_to_ptr.vmem [resolvable:$true] %s295
          %298 = dma.hbm_to_vmem [thread:$0]  %s294, 16, %s296, %s285
        $region20: #{tpu_custom_call.1} parent=15 // pred_fallthru
          _
        // Predicated region
        $region21: #{tpu_custom_call.1} parent=15 // pred_check
          %p299 = pneg %p90
        $region22: #{tpu_custom_call.1} parent=15 // pred_check_branch
          %301 = sbr.rel (%p299) target = $region24
        $region23: #{tpu_custom_call.1} parent=15 // pred_region
          %s302 = sand.u32 %s28, 1
          %s303 = scalar_lea.sflag [#allocation6], %s302
          %s304 = sand.u32 %s80, 1
          %s305 = smul.addr %s304, 2
          %s306 = scalar_lea.vmem [#allocation5], %s305
          %308 = vsyncadd %s303, 0
          %s309 = sadd.s32 %s36, %s35
          %s310 = smul.addr %s309, 2
          %s311 = scalar_lea.hbm %s1, %s310
          %s313 = sshll.u32 %s311, 4
          %s314 = int_to_ptr.hbm [resolvable:$true] %s313
          %s315 = sshll.u32 %s306, 4
          %s316 = int_to_ptr.vmem [resolvable:$true] %s315
          %318 = dma.hbm_to_vmem [thread:$0]  %s314, 32, %s316, %s303
        $region24: #{tpu_custom_call.1} parent=15 // pred_fallthru
          _
        // Predicated region
        $region25: #{tpu_custom_call.1} parent=15 // pred_check
          %p319 = pneg %p118
        $region26: #{tpu_custom_call.1} parent=15 // pred_check_branch
          %321 = sbr.rel (%p319) target = $region28
        $region27: #{tpu_custom_call.1} parent=15 // pred_region
          %s322 = sand.u32 %s28, 1
          %s323 = scalar_lea.sflag [#allocation6], %s322
          %s324 = sand.u32 %s108, 1
          %s325 = smul.addr %s324, 2
          %s326 = scalar_lea.vmem [#allocation7], %s325
          %328 = vsyncadd %s323, 0
          %s329 = sadd.s32 %s36, %s35
          %s330 = smul.addr %s329, 2
          %s331 = scalar_lea.hbm %s2, %s330
          %s333 = sshll.u32 %s331, 4
          %s334 = int_to_ptr.hbm [resolvable:$true] %s333
          %s335 = sshll.u32 %s326, 4
          %s336 = int_to_ptr.vmem [resolvable:$true] %s335
          %338 = dma.hbm_to_vmem [thread:$0]  %s334, 32, %s336, %s323
        $region28: #{tpu_custom_call.1} parent=15 // pred_fallthru
          _
        // Predicated region
        $region29: #{tpu_custom_call.1} parent=15 // pred_check
          %p339 = pneg %p146
        $region30: #{tpu_custom_call.1} parent=15 // pred_check_branch
          %341 = sbr.rel (%p339) target = $region32
        $region31: #{tpu_custom_call.1} parent=15 // pred_region
          %s342 = sand.u32 %s28, 1
          %s343 = scalar_lea.sflag [#allocation9], %s342
          %s344 = sand.u32 %s136, 1
          %s345 = smul.addr %s344, 2
          %s346 = scalar_lea.vmem [#allocation8], %s345
          %348 = vsyncadd %s343, 0
          %s349 = sadd.s32 %s36, %s35
          %s350 = smul.addr %s349, 2
          %s351 = scalar_lea.hbm %s3, %s350
          %s353 = sshll.u32 %s351, 4
          %s354 = int_to_ptr.hbm [resolvable:$true] %s353
          %s355 = sshll.u32 %s346, 4
          %s356 = int_to_ptr.vmem [resolvable:$true] %s355
          %358 = dma.hbm_to_vmem [thread:$0]  %s354, 32, %s356, %s343
        $region32: #{tpu_custom_call.1} parent=15 // pred_fallthru
          _
        // Predicated region
        $region33: #{tpu_custom_call.1} parent=15 // pred_check
          %p359 = pneg %p174
        $region34: #{tpu_custom_call.1} parent=15 // pred_check_branch
          %361 = sbr.rel (%p359) target = $region36
        $region35: #{tpu_custom_call.1} parent=15 // pred_region
          %s362 = sand.u32 %s28, 1
          %s363 = scalar_lea.sflag [#allocation9], %s362
          %s364 = sand.u32 %s164, 1
          %s365 = smul.addr %s364, 2
          %s366 = scalar_lea.vmem [#allocation10], %s365
          %368 = vsyncadd %s363, 0
          %s369 = sadd.s32 %s36, %s35
          %s370 = smul.addr %s369, 2
          %s371 = scalar_lea.hbm %s4, %s370
          %s373 = sshll.u32 %s371, 4
          %s374 = int_to_ptr.hbm [resolvable:$true] %s373
          %s375 = sshll.u32 %s366, 4
          %s376 = int_to_ptr.vmem [resolvable:$true] %s375
          %378 = dma.hbm_to_vmem [thread:$0]  %s374, 32, %s376, %s363
        $region36: #{tpu_custom_call.1} parent=15 // pred_fallthru
          _
        // Predicated region
        $region37: #{tpu_custom_call.1} parent=15 // pred_check
          %p379 = pneg %p202
        $region38: #{tpu_custom_call.1} parent=15 // pred_check_branch
          %381 = sbr.rel (%p379) target = $region40
        $region39: #{tpu_custom_call.1} parent=15 // pred_region
          %s382 = sand.u32 %s28, 1
          %s383 = scalar_lea.sflag [#allocation12], %s382
          %s384 = sand.u32 %s192, 1
          %s385 = smul.addr %s384, 6
          %s386 = scalar_lea.vmem [#allocation11], %s385
          %388 = vsyncadd %s383, 0
          %s389 = smul.addr %s35, 3
          %s390 = sadd.s32 %s36, %s389
          %s391 = smul.addr %s390, 2
          %s392 = scalar_lea.hbm %s5, %s391
          %s393 = sshll.u32 %s392, 4
          %s394 = int_to_ptr.hbm [resolvable:$true] %s393
          %s395 = sshll.u32 %s386, 4
          %s396 = int_to_ptr.vmem [resolvable:$true] %s395
          %401 = dma.hbm_to_vmem [thread:$0]  %s394, 96, %s396, %s383, 32, 32, 2
        $region40: #{tpu_custom_call.1} parent=15 // pred_fallthru
          _
        // Predicated region
        $region41: #{tpu_custom_call.1} parent=15 // pred_check
          %p402 = pneg %p230
        $region42: #{tpu_custom_call.1} parent=15 // pred_check_branch
          %404 = sbr.rel (%p402) target = $region44
        $region43: #{tpu_custom_call.1} parent=15 // pred_region
          %s405 = sand.u32 %s28, 1
          %s406 = scalar_lea.sflag [#allocation12], %s405
          %s407 = sand.u32 %s220, 1
          %s408 = smul.addr %s407, 6
          %s409 = scalar_lea.vmem [#allocation13], %s408
          %411 = vsyncadd %s406, 0
          %s412 = smul.addr %s35, 3
          %s413 = sadd.s32 %s36, %s412
          %s414 = smul.addr %s413, 2
          %s415 = scalar_lea.hbm %s6, %s414
          %s416 = sshll.u32 %s415, 4
          %s417 = int_to_ptr.hbm [resolvable:$true] %s416
          %s418 = sshll.u32 %s409, 4
          %s419 = int_to_ptr.vmem [resolvable:$true] %s418
          %424 = dma.hbm_to_vmem [thread:$0]  %s417, 96, %s419, %s406, 32, 32, 2
        $region44: #{tpu_custom_call.1} parent=15 // pred_fallthru
          _
      $region16: #{tpu_custom_call.1} parent=5 // pred_fallthru
        _
      %p425 = scmp.le.s32.totalorder 1, %s28
      %p426 = scmp.lt.s32.totalorder %s28, 3
      %p427 = pnand %p425, %p426
      %p428 = pneg %p427
      // Predicated region
      $region45: #{tpu_custom_call.1} parent=5 // pred_check
        _
      $region46: #{tpu_custom_call.1} parent=5 // pred_check_branch
        %430 = sbr.rel (%p427) target = $region48
      $region47: #{tpu_custom_call.1} parent=5 // pred_region
        %s431 = ssub.s32 %s28, 1
        %s432 = sand.u32 %s55, 1
        %s433 = scalar_lea.sflag [#allocation3], %s432
        %s434 = sand.u32 %s55, 1
        %s435 = scalar_lea.vmem [#allocation2], %s434
        // Predicated region
        $region49: #{tpu_custom_call.1} parent=47 // pred_check
          %p436 = pneg %p68
        $region50: #{tpu_custom_call.1} parent=47 // pred_check_branch
          %438 = sbr.rel (%p436) target = $region52
        $region51: #{tpu_custom_call.1} parent=47 // pred_region
          %440 = dma.done %s433, 16
        $region52: #{tpu_custom_call.1} parent=47 // pred_fallthru
          _
        %s441 = sand.u32 %s33, 1
        %s442 = scalar_lea.sflag [#allocation6], %s441
        %s443 = sand.u32 %s83, 1
        %s444 = smul.addr %s443, 2
        %s445 = scalar_lea.vmem [#allocation5], %s444
        // Predicated region
        $region53: #{tpu_custom_call.1} parent=47 // pred_check
          %p446 = pneg %p96
        $region54: #{tpu_custom_call.1} parent=47 // pred_check_branch
          %448 = sbr.rel (%p446) target = $region56
        $region55: #{tpu_custom_call.1} parent=47 // pred_region
          %450 = dma.done %s442, 32
        $region56: #{tpu_custom_call.1} parent=47 // pred_fallthru
          _
        %s451 = sand.u32 %s33, 1
        %s452 = scalar_lea.sflag [#allocation6], %s451
        %s453 = sand.u32 %s111, 1
        %s454 = smul.addr %s453, 2
        %s455 = scalar_lea.vmem [#allocation7], %s454
        // Predicated region
        $region57: #{tpu_custom_call.1} parent=47 // pred_check
          %p456 = pneg %p124
        $region58: #{tpu_custom_call.1} parent=47 // pred_check_branch
          %458 = sbr.rel (%p456) target = $region60
        $region59: #{tpu_custom_call.1} parent=47 // pred_region
          %460 = dma.done %s452, 32
        $region60: #{tpu_custom_call.1} parent=47 // pred_fallthru
          _
        %s461 = sand.u32 %s33, 1
        %s462 = scalar_lea.sflag [#allocation9], %s461
        %s463 = sand.u32 %s139, 1
        %s464 = smul.addr %s463, 2
        %s465 = scalar_lea.vmem [#allocation8], %s464
        // Predicated region
        $region61: #{tpu_custom_call.1} parent=47 // pred_check
          %p466 = pneg %p152
        $region62: #{tpu_custom_call.1} parent=47 // pred_check_branch
          %468 = sbr.rel (%p466) target = $region64
        $region63: #{tpu_custom_call.1} parent=47 // pred_region
          %470 = dma.done %s462, 32
        $region64: #{tpu_custom_call.1} parent=47 // pred_fallthru
          _
        %s471 = sand.u32 %s33, 1
        %s472 = scalar_lea.sflag [#allocation9], %s471
        %s473 = sand.u32 %s167, 1
        %s474 = smul.addr %s473, 2
        %s475 = scalar_lea.vmem [#allocation10], %s474
        // Predicated region
        $region65: #{tpu_custom_call.1} parent=47 // pred_check
          %p476 = pneg %p180
        $region66: #{tpu_custom_call.1} parent=47 // pred_check_branch
          %478 = sbr.rel (%p476) target = $region68
        $region67: #{tpu_custom_call.1} parent=47 // pred_region
          %480 = dma.done %s472, 32
        $region68: #{tpu_custom_call.1} parent=47 // pred_fallthru
          _
        %s481 = sand.u32 %s33, 1
        %s482 = scalar_lea.sflag [#allocation12], %s481
        %s483 = sand.u32 %s195, 1
        %s484 = smul.addr %s483, 6
        %s485 = scalar_lea.vmem [#allocation11], %s484
        // Predicated region
        $region69: #{tpu_custom_call.1} parent=47 // pred_check
          %p486 = pneg %p208
        $region70: #{tpu_custom_call.1} parent=47 // pred_check_branch
          %488 = sbr.rel (%p486) target = $region72
        $region71: #{tpu_custom_call.1} parent=47 // pred_region
          %490 = dma.done %s482, 96
        $region72: #{tpu_custom_call.1} parent=47 // pred_fallthru
          _
        %s491 = sand.u32 %s33, 1
        %s492 = scalar_lea.sflag [#allocation12], %s491
        %s493 = sand.u32 %s223, 1
        %s494 = smul.addr %s493, 6
        %s495 = scalar_lea.vmem [#allocation13], %s494
        // Predicated region
        $region73: #{tpu_custom_call.1} parent=47 // pred_check
          %p496 = pneg %p236
        $region74: #{tpu_custom_call.1} parent=47 // pred_check_branch
          %498 = sbr.rel (%p496) target = $region76
        $region75: #{tpu_custom_call.1} parent=47 // pred_region
          %500 = dma.done %s492, 96
        $region76: #{tpu_custom_call.1} parent=47 // pred_fallthru
          _
        %s501 = sand.u32 %s55, 1
        %s502 = scalar_lea.sflag [#allocation3], %s501
        %s503 = sand.u32 %s55, 1
        %s504 = scalar_lea.vmem [#allocation2], %s503
        %p505 = pneg %p68
        %p506 = pneg %p65
        %s507 = sand.u32 %s33, 1
        %s508 = scalar_lea.sflag [#allocation6], %s507
        %s509 = sand.u32 %s83, 1
        %s510 = smul.addr %s509, 2
        %s511 = scalar_lea.vmem [#allocation5], %s510
        %p512 = pneg %p96
        %p513 = pneg %p93
        %s514 = sand.u32 %s33, 1
        %s515 = scalar_lea.sflag [#allocation6], %s514
        %s516 = sand.u32 %s111, 1
        %s517 = smul.addr %s516, 2
        %s518 = scalar_lea.vmem [#allocation7], %s517
        %p519 = pneg %p124
        %p520 = pneg %p121
        %s521 = sand.u32 %s33, 1
        %s522 = scalar_lea.sflag [#allocation9], %s521
        %s523 = sand.u32 %s139, 1
        %s524 = smul.addr %s523, 2
        %s525 = scalar_lea.vmem [#allocation8], %s524
        %p526 = pneg %p152
        %p527 = pneg %p149
        %s528 = sand.u32 %s33, 1
        %s529 = scalar_lea.sflag [#allocation9], %s528
        %s530 = sand.u32 %s167, 1
        %s531 = smul.addr %s530, 2
        %s532 = scalar_lea.vmem [#allocation10], %s531
        %p533 = pneg %p180
        %p534 = pneg %p177
        %s535 = sand.u32 %s33, 1
        %s536 = scalar_lea.sflag [#allocation12], %s535
        %s537 = sand.u32 %s195, 1
        %s538 = smul.addr %s537, 6
        %s539 = scalar_lea.vmem [#allocation11], %s538
        %p540 = pneg %p208
        %p541 = pneg %p205
        %s542 = sand.u32 %s33, 1
        %s543 = scalar_lea.sflag [#allocation12], %s542
        %s544 = sand.u32 %s223, 1
        %s545 = smul.addr %s544, 6
        %s546 = scalar_lea.vmem [#allocation13], %s545
        %p547 = pneg %p236
        %p548 = pneg %p233
        %p549 = pneg %p262
        %p550 = pneg %p259
        %s551 = sand.u32 %s249, 1
        %s552 = scalar_lea.sflag [#allocation4], %s551
        %s553 = sand.u32 %s249, 1
        %s554 = smul.addr %s553, 10
        %s555 = scalar_lea.vmem [#allocation14], %s554
        %p556 = scmp.eq.s32.totalorder %s38, 0
        // Predicated region
        $region77: #{tpu_custom_call.1} parent=47 // pred_check
          %p557 = pneg %p556
        $region78: #{tpu_custom_call.1} parent=47 // pred_check_branch
          %559 = sbr.rel (%p557) target = $region80
        $region79: #{tpu_custom_call.1} parent=47 // pred_region
          %560 = vst [vmem:[%s555] sm:$0x3] 0.0
          %561 = vst [vmem:[%s555 + $0x2] sm:$0x3] 0.0
          %562 = vst [vmem:[%s555 + $0x4] sm:$0x3] 0.0
          %563 = vst [vmem:[%s555 + $0x6] sm:$0x3] 0.0
          %564 = vst [vmem:[%s555 + $0x8] sm:$0x3] 0.0
        $region80: #{tpu_custom_call.1} parent=47 // pred_fallthru
          _
        %v565 = vld [vmem:[%s455] sm:$0x3]
        %v566 = vld [vmem:[%s445] sm:$0x3]
        %v567 = vld [vmem:[%s435] sm:$0x1]
        %v568 = vunpack.c.0.s8 %v567
        %v569 = vcvt.s32.f32 %v568
        %v570 = vsub.f32 %v565, %v566
        %v571 = vand.u32 2147483647, %v570
        %v572 = vmul.f32 %v569, %v571
        %v573 = vld [vmem:[%s465] sm:$0x3]
        %v574 = vsub.f32 %v565, %v573
        %v575 = vld [vmem:[%s475] sm:$0x3]
        %v576 = vsub.f32 %v565, %v575
        %v577 = vmul.f32 %v574, %v574
        %v578 = vmul.f32 %v576, %v576
        %v579 = vld [vmem:[%s485] sm:$0x3]
        %v580 = vld [vmem:[%s495] sm:$0x3]
        %v581 = vmul.f32 %v579, %v580
        %v582 = vmul.f32 %v579, %v579
        %v583 = vmul.f32 %v580, %v580
        %s584 = scalar_lea.vmem %s485, 2 [#allocation11]
        %v585 = vld [vmem:[%s584] sm:$0x3]
        %s586 = scalar_lea.vmem %s495, 2 [#allocation13]
        %v587 = vld [vmem:[%s586] sm:$0x3]
        %v588 = vmul.f32 %v585, %v587
        %v589 = vadd.f32 %v581, %v588
        %v590 = vmul.f32 %v585, %v585
        %v591 = vadd.f32 %v582, %v590
        %v592 = vmul.f32 %v587, %v587
        %v593 = vadd.f32 %v583, %v592
        %s594 = scalar_lea.vmem %s485, 4 [#allocation11]
        %v595 = vld [vmem:[%s594] sm:$0x3]
        %s596 = scalar_lea.vmem %s495, 4 [#allocation13]
        %v597 = vld [vmem:[%s596] sm:$0x3]
        %v598 = vmul.f32 %v595, %v597
        %v599 = vadd.f32 %v589, %v598
        %v600 = vmul.f32 %v595, %v595
        %v601 = vadd.f32 %v591, %v600
        %v602 = vmul.f32 %v597, %v597
        %v603 = vadd.f32 %v593, %v602
        %v604 = vmul.f32 %v601, %v603
        %v605 = vmax.f32 %v604, 1e-16
        %v606 = vrsqrt.pop %v605
        %v607 = vmul.f32 %v606, %v605
        %v608 = vmul.f32 %v607, %v606
        %v609 = vmul.f32 0.5, %v608
        %v610 = vsub.f32 1.5, %v609
        %v611 = vmul.f32 %v606, %v610
        %vm612 = vweird.f32 %v605
        %vm613 = vweird.f32 %v606
        %vm614 = vmor %vm612, %vm613
        %v615 = vsel %vm614, %v606, %v611
        %v616 = vmul.f32 %v599, %v615
        %v617 = vld [vmem:[%s555] sm:$0x3]
        %v618 = vadd.f32 %v617, %v572
        %619 = vst [vmem:[%s555] sm:$0x3] %v618
        %s620 = scalar_lea.vmem %s555, 2 [#allocation14]
        %v621 = vld [vmem:[%s620] sm:$0x3]
        %v622 = vadd.f32 %v621, %v569
        %623 = vst [vmem:[%s620] sm:$0x3] %v622
        %s624 = scalar_lea.vmem %s555, 4 [#allocation14]
        %v625 = vld [vmem:[%s624] sm:$0x3]
        %v626 = vadd.f32 %v625, %v577
        %627 = vst [vmem:[%s624] sm:$0x3] %v626
        %s628 = scalar_lea.vmem %s555, 6 [#allocation14]
        %v629 = vld [vmem:[%s628] sm:$0x3]
        %v630 = vadd.f32 %v629, %v578
        %631 = vst [vmem:[%s628] sm:$0x3] %v630
        %s632 = scalar_lea.vmem %s555, 8 [#allocation14]
        %v633 = vld [vmem:[%s632] sm:$0x3]
        %v634 = vadd.f32 %v633, %v616
        %635 = vst [vmem:[%s632] sm:$0x3] %v634
        %s636 = sand.u32 %s249, 1
        %s637 = scalar_lea.sflag [#allocation4], %s636
        %s638 = sand.u32 %s249, 1
        %s639 = smul.addr %s638, 10
        %s640 = scalar_lea.vmem [#allocation14], %s639
        // Predicated region
        $region81: #{tpu_custom_call.1} parent=47 // pred_check
          %p641 = pneg %p259
        $region82: #{tpu_custom_call.1} parent=47 // pred_check_branch
          %643 = sbr.rel (%p641) target = $region84
        $region83: #{tpu_custom_call.1} parent=47 // pred_region
          %645 = vsyncadd %s637, 0
          %s646 = smul.addr %s37, 5
          %s647 = smul.addr %s646, 2
          %s648 = scalar_lea.hbm %s7, %s647
          %s649 = sshll.u32 %s640, 4
          %s650 = int_to_ptr.vmem [resolvable:$true] %s649
          %s651 = sshll.u32 %s648, 4
          %s652 = int_to_ptr.hbm [resolvable:$true] %s651
          %657 = dma.vmem_to_hbm [thread:$0]  %s650, 160, %s652, %s637, 32, 32, 2
        $region84: #{tpu_custom_call.1} parent=47 // pred_fallthru
          _
      $region48: #{tpu_custom_call.1} parent=5 // pred_fallthru
        _
      %p658 = scmp.le.s32.totalorder 2, %s28
      // Predicated region
      $region85: #{tpu_custom_call.1} parent=5 // pred_check
        %p659 = pneg %p658
      $region86: #{tpu_custom_call.1} parent=5 // pred_check_branch
        %661 = sbr.rel (%p659) target = $region88
      $region87: #{tpu_custom_call.1} parent=5 // pred_region
        %s662 = ssub.s32 %s28, 2
        // Predicated region
        $region89: #{tpu_custom_call.1} parent=87 // pred_check
          %p663 = pneg %p265
        $region90: #{tpu_custom_call.1} parent=87 // pred_check_branch
          %665 = sbr.rel (%p663) target = $region92
        $region91: #{tpu_custom_call.1} parent=87 // pred_region
          %s666 = sand.u32 %s250, 1
          %s667 = scalar_lea.sflag [#allocation4], %s666
          %s668 = sand.u32 %s250, 1
          %s669 = smul.addr %s668, 10
          %s670 = scalar_lea.vmem [#allocation14], %s669
          %672 = dma.done %s667, 160
        $region92: #{tpu_custom_call.1} parent=87 // pred_fallthru
          _
      $region88: #{tpu_custom_call.1} parent=5 // pred_fallthru
        _
    $region6: #{tpu_custom_call.1} parent=1 // loop_footer
      %s32 = sadd.s32 1, %s28
    $region7: #{tpu_custom_call.1} parent=1 // loop_footer_branch
      %27 = sbr.rel target = $region3
    $region8: #{tpu_custom_call.1} parent=1 // loop_exit
      _
    %673 = vsyncpa [#allocation3], 1
    %s674 = scalar_lea.sflag [#allocation3], 1
    %675 = vsyncpa %s674, 1
    %676 = vsyncpa [#allocation6], 1
    %s677 = scalar_lea.sflag [#allocation6], 1
    %678 = vsyncpa %s677, 1
    %679 = vsyncpa [#allocation9], 1
    %s680 = scalar_lea.sflag [#allocation9], 1
    %681 = vsyncpa %s680, 1
    %682 = vsyncpa [#allocation12], 1
    %s683 = scalar_lea.sflag [#allocation12], 1
    %684 = vsyncpa %s683, 1
    %685 = vsyncpa [#allocation4], 1
    %s686 = scalar_lea.sflag [#allocation4], 1
    %687 = vsyncpa %s686, 1

</llo_original>
